<compile_context>
chip_gen: v7x
topology: tpu7x:2x2x1
jax: 0.10.0
libtpu: 0.0.40
codegen_flags: <defaults>
</compile_context>

<pallas_src>
import functools

import jax
import jax.numpy as jnp
import numpy as np
from jax import lax
from jax.experimental import pallas as pl
from jax.experimental.pallas import tpu as pltpu

VOCAB = 30522
MAX_POS = 512
N_TYPES = 2
LN_EPS = 1e-12


def _layer_norm(e, gamma, beta):
    mu = jnp.mean(e, axis=-1, keepdims=True)
    var = jnp.mean((e - mu) ** 2, axis=-1, keepdims=True)
    return (e - mu) * lax.rsqrt(var + LN_EPS) * gamma + beta


# ---------------------------------------------------------------------------
# Variant A: word table resident in VMEM (one big sequential DMA, then
# in-kernel dynamic row reads).  Best on v5e/v6e (128 MiB VMEM) / bf16 tables.
# ---------------------------------------------------------------------------
def _embed_kernel_resident(ids_ref,        # SMEM (B, S) int32 (scalar prefetch)
                           word_ref,       # VMEM (VOCAB, H) resident table
                           postok_ref,     # VMEM (S, H) f32 resident pos+tok
                           *rest,          # [adv], gamma, beta, out, gather
                           has_adv):
    if has_adv:
        adv_ref, gamma_ref, beta_ref, out_ref, gather = rest
    else:
        adv_ref = None
        gamma_ref, beta_ref, out_ref, gather = rest

    b = pl.program_id(0)
    t = pl.program_id(1)
    tile_s, _ = out_ref.shape                  # static
    vocab = word_ref.shape[0]
    base = t * tile_s

    def gather_row(s, carry):
        # Guard against out-of-range ids (no runtime bounds check on TPU).
        tok = jnp.clip(ids_ref[b, base + s], 0, vocab - 1)
        gather[pl.ds(s, 1), :] = word_ref[pl.ds(tok, 1), :]
        return carry

    lax.fori_loop(0, tile_s, gather_row, 0,
                  unroll=(True if tile_s <= 32 else 8))

    start = pl.multiple_of(base, 8) if tile_s % 8 == 0 else base
    e = gather[...].astype(jnp.float32) + postok_ref[pl.ds(start, tile_s), :]
    if adv_ref is not None:
        e = e + adv_ref[...].astype(jnp.float32)
    out_ref[...] = _layer_norm(e, gamma_ref[...], beta_ref[...]).astype(out_ref.dtype)
    # TODO(synk): nn.Dropout(0.1) is stochastic training-time only; eval-mode
    # (identity) semantics are implemented here.


# ---------------------------------------------------------------------------
# Variant B: table stays in HBM; rows DMA'd in double-buffered groups and the
# add+LayerNorm of group g overlaps the DMAs of group g+1.  Used when the
# table does not fit the VMEM budget (e.g. v7x 64 MiB).
# ---------------------------------------------------------------------------
def _embed_kernel_hbm_gather(ids_ref,      # SMEM (B, S) int32 (scalar prefetch)
                             word_hbm,     # HBM  (VOCAB, H) (memory_space=ANY)
                             postok_ref,   # VMEM (S, H) f32 resident pos+tok
                             *rest,        # [adv], gamma, beta, out, gather, sems
                             group, vocab, has_adv):
    if has_adv:
        adv_ref, gamma_ref, beta_ref, out_ref, gather, sems = rest
    else:
        adv_ref = None
        gamma_ref, beta_ref, out_ref, gather, sems = rest

    b = pl.program_id(0)
    t = pl.program_id(1)
    tile_s, _ = out_ref.shape                  # static
    n_groups = tile_s // group                 # static
    base = t * tile_s

    def start_group(g):
        parity = g % 2
        for i in range(group):                 # 'group' DMAs in flight at once
            s = g * group + i
            tok = jnp.clip(ids_ref[b, base + s], 0, vocab - 1)  # read id once
            pltpu.make_async_copy(
                word_hbm.at[pl.ds(tok, 1), :],
                gather.at[pl.ds(s, 1), :],
                sems.at[parity],
            ).start()

    def wait_group(g):
        parity = g % 2
        for i in range(group):
            s = g * group + i
            # Fixed source slice: the wait only needs shape/dst/sem, so no
            # id-dependent SMEM read happens right before the wait.
            pltpu.make_async_copy(
                word_hbm.at[pl.ds(0, 1), :],
                gather.at[pl.ds(s, 1), :],
                sems.at[parity],
            ).wait()

    start_group(0)                             # prime the pipeline

    @pl.loop(0, n_groups)
    def _(g):
        if n_groups > 1:                       # static guard
            @pl.when(g + 1 < n_groups)
            def _():
                start_group(g + 1)             # next group in flight ...
        wait_group(g)                          # ... while we finish this one

        row0 = pl.multiple_of(g * group, group)
        e = gather[pl.ds(row0, group), :].astype(jnp.float32)
        e = e + postok_ref[pl.ds(pl.multiple_of(base + g * group, group), group), :]
        if adv_ref is not None:
            e = e + adv_ref[pl.ds(row0, group), :].astype(jnp.float32)
        out_ref[pl.ds(row0, group), :] = _layer_norm(
            e, gamma_ref[...], beta_ref[...]).astype(out_ref.dtype)
    # TODO(synk): nn.Dropout(0.1) omitted (eval-mode identity).


# ---------------------------------------------------------------------------
# Wrapper
# ---------------------------------------------------------------------------
def _pick_tile_s(S):
    if S <= 512:
        return S
    for cand in (512, 256, 128, 64, 32, 16, 8):
        if S % cand == 0:
            return cand
    return S   # TODO(synk): cap for very long, oddly-sized sequences.


def _pick_group(tile_s):
    for g in (32, 16, 8, 4, 2, 1):
        if tile_s % g == 0:
            return g
    return 1


def _padded_vmem_bytes(shape, dtype):
    """(8*packing, 128)-padded VMEM footprint of one buffer."""
    itemsize = np.dtype(dtype).itemsize
    packing = max(1, 4 // itemsize)
    rows = int(np.prod(shape[:-1])) if len(shape) > 1 else 1
    cols = int(shape[-1])
    rows_p = -(-rows // (8 * packing)) * (8 * packing)
    cols_p = -(-cols // 128) * 128
    return rows_p * cols_p * itemsize


def _vmem_capacity_bytes():
    try:
        cap = getattr(pltpu.get_tpu_info(), "vmem_capacity_bytes", None)
        if cap:
            return int(cap)
    except Exception:
        pass
    return 64 << 20        # conservative default (v7x per-core VMEM)


def bert_embeddings(input_ids, word_emb, pos_emb, tok_emb, gamma, beta,
                    adv_training=False, adv_delta_txt=None,
                    out_dtype=None, table_in_vmem=None):
    B, S = input_ids.shape
    vocab, H = word_emb.shape
    out_dtype = word_emb.dtype if out_dtype is None else out_dtype

    tile_s = _pick_tile_s(S)
    grid = (B, S // tile_s)

    # token_type_ids are all zeros in the reference module, so the token-type
    # contribution is row 0 broadcast; fuse it with the position rows once
    # (tiny (S, H) f32 constant, held resident in VMEM).
    postok = (pos_emb[:S].astype(jnp.float32)
              + tok_emb[0].astype(jnp.float32)[None, :])
    gamma2 = gamma.reshape(1, H).astype(jnp.float32)
    beta2 = beta.reshape(1, H).astype(jnp.float32)

    has_adv = bool(adv_training) and adv_delta_txt is not None

    # ---- VMEM budgeting: resident-table vs HBM ring-gather -----------------
    work = 2 * _padded_vmem_bytes((S, H), jnp.float32)            # postok
    work += 2 * _padded_vmem_bytes((tile_s, H), out_dtype)        # out tile
    work += 4 * _padded_vmem_bytes((1, H), jnp.float32)           # gamma, beta
    work += _padded_vmem_bytes((tile_s, H), word_emb.dtype)       # gather scratch
    if has_adv:
        work += 2 * _padded_vmem_bytes((tile_s, H), adv_delta_txt.dtype)
    table_vmem = 2 * _padded_vmem_bytes((vocab, H), word_emb.dtype)  # dbl-buffered

    cap = _vmem_capacity_bytes()
    if table_in_vmem is None:
        table_in_vmem = (table_vmem + work) <= (cap - (16 << 20))

    need = work + (table_vmem if table_in_vmem else 0)
    vmem_limit = int(min(max(need + (16 << 20), 32 << 20), cap - (4 << 20)))

    # ---- specs --------------------------------------------------------------
    if table_in_vmem:
        word_spec = pl.BlockSpec((vocab, H), lambda b, t, ids: (0, 0))  # resident
    else:
        word_spec = pl.BlockSpec(memory_space=pl.ANY)                   # raw HBM

    in_specs = [
        word_spec,
        pl.BlockSpec((S, H), lambda b, t, ids: (0, 0)),                 # postok
    ]
    args = [word_emb, postok]
    if has_adv:
        in_specs.append(
            pl.BlockSpec((None, tile_s, H), lambda b, t, ids: (b, t, 0)))
        args.append(adv_delta_txt)
    in_specs += [
        pl.BlockSpec((1, H), lambda b, t, ids: (0, 0)),                 # gamma
        pl.BlockSpec((1, H), lambda b, t, ids: (0, 0)),                 # beta
    ]
    args += [gamma2, beta2]

    scratch = [pltpu.VMEM((tile_s, H), word_emb.dtype)]                 # gathered rows
    if table_in_vmem:
        kernel = functools.partial(_embed_kernel_resident, has_adv=has_adv)
    else:
        scratch.append(pltpu.SemaphoreType.DMA((2,)))                   # group parity
        kernel = functools.partial(_embed_kernel_hbm_gather,
                                   group=_pick_group(tile_s),
                                   vocab=vocab, has_adv=has_adv)

    grid_spec = pltpu.PrefetchScalarGridSpec(
        num_scalar_prefetch=1,                                          # ids -> SMEM
        grid=grid,
        in_specs=in_specs,
        out_specs=pl.BlockSpec((None, tile_s, H), lambda b, t, ids: (b, t, 0)),
        scratch_shapes=scratch,
    )

    return pl.pallas_call(
        kernel,
        out_shape=jax.ShapeDtypeStruct((B, S, H), out_dtype),
        grid_spec=grid_spec,
        compiler_params=pltpu.CompilerParams(
            dimension_semantics=("parallel", "parallel"),
            vmem_limit_bytes=vmem_limit,
        ),
    )(input_ids.astype(jnp.int32), *args)


# ---------------------------------------------------------------------------
# Reference + smoke test
# ---------------------------------------------------------------------------
def _reference(input_ids, word, pos, tok, gamma, beta, adv):
    word = word.astype(jnp.float32)
    pos = pos.astype(jnp.float32)
    tok = tok.astype(jnp.float32)
    S = input_ids.shape[1]
    e = word[input_ids] + pos[:S][None, :, :] + tok[0][None, None, :]
    if adv is not None:
        e = e + adv.astype(jnp.float32)
    mu = e.mean(-1, keepdims=True)
    var = ((e - mu) ** 2).mean(-1, keepdims=True)
    return (e - mu) / jnp.sqrt(var + LN_EPS) * gamma + beta


if __name__ == "__main__":
    B, S, H = 2, 8, 32

    key = jax.random.PRNGKey(0)
    k1, k2, k3, k4, k5 = jax.random.split(key, 5)

    # Deterministic synthetic parameters (BERT-style init: N(0, 0.02)).
    word = 0.02 * jax.random.normal(k1, (VOCAB, H), jnp.float32)
    word = word.at[0].set(0.0)                       # padding_idx = 0
    pos = 0.02 * jax.random.normal(k2, (MAX_POS, H), jnp.float32)
    tok = 0.02 * jax.random.normal(k3, (N_TYPES, H), jnp.float32)
    gamma = jnp.ones((H,), jnp.float32)              # LayerNorm weight
    beta = jnp.zeros((H,), jnp.float32)              # LayerNorm bias

    input_ids = jax.random.randint(k4, (B, S), 1, VOCAB, dtype=jnp.int32)
    adv = 0.01 * jax.random.normal(k5, (B, S, H), jnp.float32)

    # 1) adv_training=True, VMEM-resident table path (v5e/v6e-style).
    out1 = jax.block_until_ready(
        bert_embeddings(input_ids, word, pos, tok, gamma, beta,
                        adv_training=True, adv_delta_txt=adv,
                        table_in_vmem=True))
    ref1 = _reference(input_ids, word, pos, tok, gamma, beta, adv)
    np.testing.assert_allclose(np.asarray(out1), np.asarray(ref1),
                               atol=1e-5, rtol=1e-5)

    # 2) adv_training=False, HBM ring-gather path (v7x / big-table fallback).
    out2 = jax.block_until_ready(
        bert_embeddings(input_ids, word, pos, tok, gamma, beta,
                        adv_training=False, table_in_vmem=False))
    ref2 = _reference(input_ids, word, pos, tok, gamma, beta, None)
    np.testing.assert_allclose(np.asarray(out2), np.asarray(ref2),
                               atol=1e-5, rtol=1e-5)

    # 3) bf16 table / bf16 adv / bf16 output, auto path selection.
    word16 = word.astype(jnp.bfloat16)
    adv16 = adv.astype(jnp.bfloat16)
    out3 = jax.block_until_ready(
        bert_embeddings(input_ids, word16, pos, tok, gamma, beta,
                        adv_training=True, adv_delta_txt=adv16))
    ref3 = _reference(input_ids, word16, pos, tok, gamma, beta, adv16)
    np.testing.assert_allclose(np.asarray(out3.astype(jnp.float32)),
                               np.asarray(ref3), atol=3e-2, rtol=3e-2)

    print("KERNEL_OK")
</pallas_src>

<mosaic_0001>
module attributes {stable_mosaic.version = 11 : i64} {
  func.func @_embed_kernel_resident(%arg0: i32, %arg1: i32, %arg2: memref<2x8xi32, #tpu.memory_space<smem>>, %arg3: memref<30522x32xf32, #tpu.memory_space<vmem>>, %arg4: memref<8x32xf32, #tpu.memory_space<vmem>>, %arg5: memref<1x8x32xf32, #tpu.memory_space<vmem>>, %arg6: memref<1x32xf32, #tpu.memory_space<vmem>>, %arg7: memref<1x32xf32, #tpu.memory_space<vmem>>, %arg8: memref<1x8x32xf32, #tpu.memory_space<vmem>>, %arg9: memref<8x32xf32, #tpu.memory_space<vmem>>) attributes {dimension_semantics = [#tpu.dimension_semantics<parallel>, #tpu.dimension_semantics<parallel>], iteration_bounds = array<i64: 2, 1>, scalar_prefetch = 1 : i64, scratch_operands = 1 : i64, tpu.core_type = #tpu.core_type<tc>, window_params = [{pipeline_mode = #tpu.pipeline_mode<synchronous>, transform_indices = @transform_0, window_bounds = array<i64: 30522, 32>}, {pipeline_mode = #tpu.pipeline_mode<synchronous>, transform_indices = @transform_1, window_bounds = array<i64: 8, 32>}, {transform_indices = @transform_2, window_bounds = array<i64: 1, 8, 32>}, {pipeline_mode = #tpu.pipeline_mode<synchronous>, transform_indices = @transform_3, window_bounds = array<i64: 1, 32>}, {pipeline_mode = #tpu.pipeline_mode<synchronous>, transform_indices = @transform_4, window_bounds = array<i64: 1, 32>}, {transform_indices = @transform_5, window_bounds = array<i64: 1, 8, 32>}]} {
    %c8_i32 = arith.constant 8 : i32
    %0 = arith.muli %arg1, %c8_i32 : i32
    %c0_i32 = arith.constant 0 : i32
    %1 = arith.addi %0, %c0_i32 : i32
    %2 = arith.index_cast %arg0 : i32 to index
    %3 = arith.index_cast %1 : i32 to index
    %4 = memref.load %arg2[%2, %3] : memref<2x8xi32, #tpu.memory_space<smem>>
    %c0_i32_0 = arith.constant 0 : i32
    %c30521_i32 = arith.constant 30521 : i32
    %5 = arith.maxsi %c0_i32_0, %4 : i32
    %6 = arith.minsi %c30521_i32, %5 : i32
    %7 = arith.index_cast %6 : i32 to index
    %c0 = arith.constant 0 : index
    %8 = vector.load %arg3[%7, %c0] : memref<30522x32xf32, #tpu.memory_space<vmem>>, vector<1x32xf32>
    %9 = arith.index_cast %c0_i32 : i32 to index
    %c0_1 = arith.constant 0 : index
    %10 = vector.load %arg9[%9, %c0_1] : memref<8x32xf32, #tpu.memory_space<vmem>>, vector<1x32xf32>
    tpu.vector_store %arg9[%9, %c0_1], %8 {strides = array<i32>} : memref<8x32xf32, #tpu.memory_space<vmem>>, vector<1x32xf32>,
    %c1_i32 = arith.constant 1 : i32
    %11 = arith.addi %0, %c1_i32 : i32
    %12 = arith.index_cast %arg0 : i32 to index
    %13 = arith.index_cast %11 : i32 to index
    %14 = memref.load %arg2[%12, %13] : memref<2x8xi32, #tpu.memory_space<smem>>
    %c0_i32_2 = arith.constant 0 : i32
    %c30521_i32_3 = arith.constant 30521 : i32
    %15 = arith.maxsi %c0_i32_2, %14 : i32
    %16 = arith.minsi %c30521_i32_3, %15 : i32
    %17 = arith.index_cast %16 : i32 to index
    %c0_4 = arith.constant 0 : index
    %18 = vector.load %arg3[%17, %c0_4] : memref<30522x32xf32, #tpu.memory_space<vmem>>, vector<1x32xf32>
    %19 = arith.index_cast %c1_i32 : i32 to index
    %c0_5 = arith.constant 0 : index
    %20 = vector.load %arg9[%19, %c0_5] : memref<8x32xf32, #tpu.memory_space<vmem>>, vector<1x32xf32>
    tpu.vector_store %arg9[%19, %c0_5], %18 {strides = array<i32>} : memref<8x32xf32, #tpu.memory_space<vmem>>, vector<1x32xf32>,
    %c2_i32 = arith.constant 2 : i32
    %21 = arith.addi %0, %c2_i32 : i32
    %22 = arith.index_cast %arg0 : i32 to index
    %23 = arith.index_cast %21 : i32 to index
    %24 = memref.load %arg2[%22, %23] : memref<2x8xi32, #tpu.memory_space<smem>>
    %c0_i32_6 = arith.constant 0 : i32
    %c30521_i32_7 = arith.constant 30521 : i32
    %25 = arith.maxsi %c0_i32_6, %24 : i32
    %26 = arith.minsi %c30521_i32_7, %25 : i32
    %27 = arith.index_cast %26 : i32 to index
    %c0_8 = arith.constant 0 : index
    %28 = vector.load %arg3[%27, %c0_8] : memref<30522x32xf32, #tpu.memory_space<vmem>>, vector<1x32xf32>
    %29 = arith.index_cast %c2_i32 : i32 to index
    %c0_9 = arith.constant 0 : index
    %30 = vector.load %arg9[%29, %c0_9] : memref<8x32xf32, #tpu.memory_space<vmem>>, vector<1x32xf32>
    tpu.vector_store %arg9[%29, %c0_9], %28 {strides = array<i32>} : memref<8x32xf32, #tpu.memory_space<vmem>>, vector<1x32xf32>,
    %c3_i32 = arith.constant 3 : i32
    %31 = arith.addi %0, %c3_i32 : i32
    %32 = arith.index_cast %arg0 : i32 to index
    %33 = arith.index_cast %31 : i32 to index
    %34 = memref.load %arg2[%32, %33] : memref<2x8xi32, #tpu.memory_space<smem>>
    %c0_i32_10 = arith.constant 0 : i32
    %c30521_i32_11 = arith.constant 30521 : i32
    %35 = arith.maxsi %c0_i32_10, %34 : i32
    %36 = arith.minsi %c30521_i32_11, %35 : i32
    %37 = arith.index_cast %36 : i32 to index
    %c0_12 = arith.constant 0 : index
    %38 = vector.load %arg3[%37, %c0_12] : memref<30522x32xf32, #tpu.memory_space<vmem>>, vector<1x32xf32>
    %39 = arith.index_cast %c3_i32 : i32 to index
    %c0_13 = arith.constant 0 : index
    %40 = vector.load %arg9[%39, %c0_13] : memref<8x32xf32, #tpu.memory_space<vmem>>, vector<1x32xf32>
    tpu.vector_store %arg9[%39, %c0_13], %38 {strides = array<i32>} : memref<8x32xf32, #tpu.memory_space<vmem>>, vector<1x32xf32>,
    %c4_i32 = arith.constant 4 : i32
    %41 = arith.addi %0, %c4_i32 : i32
    %42 = arith.index_cast %arg0 : i32 to index
    %43 = arith.index_cast %41 : i32 to index
    %44 = memref.load %arg2[%42, %43] : memref<2x8xi32, #tpu.memory_space<smem>>
    %c0_i32_14 = arith.constant 0 : i32
    %c30521_i32_15 = arith.constant 30521 : i32
    %45 = arith.maxsi %c0_i32_14, %44 : i32
    %46 = arith.minsi %c30521_i32_15, %45 : i32
    %47 = arith.index_cast %46 : i32 to index
    %c0_16 = arith.constant 0 : index
    %48 = vector.load %arg3[%47, %c0_16] : memref<30522x32xf32, #tpu.memory_space<vmem>>, vector<1x32xf32>
    %49 = arith.index_cast %c4_i32 : i32 to index
    %c0_17 = arith.constant 0 : index
    %50 = vector.load %arg9[%49, %c0_17] : memref<8x32xf32, #tpu.memory_space<vmem>>, vector<1x32xf32>
    tpu.vector_store %arg9[%49, %c0_17], %48 {strides = array<i32>} : memref<8x32xf32, #tpu.memory_space<vmem>>, vector<1x32xf32>,
    %c5_i32 = arith.constant 5 : i32
    %51 = arith.addi %0, %c5_i32 : i32
    %52 = arith.index_cast %arg0 : i32 to index
    %53 = arith.index_cast %51 : i32 to index
    %54 = memref.load %arg2[%52, %53] : memref<2x8xi32, #tpu.memory_space<smem>>
    %c0_i32_18 = arith.constant 0 : i32
    %c30521_i32_19 = arith.constant 30521 : i32
    %55 = arith.maxsi %c0_i32_18, %54 : i32
    %56 = arith.minsi %c30521_i32_19, %55 : i32
    %57 = arith.index_cast %56 : i32 to index
    %c0_20 = arith.constant 0 : index
    %58 = vector.load %arg3[%57, %c0_20] : memref<30522x32xf32, #tpu.memory_space<vmem>>, vector<1x32xf32>
    %59 = arith.index_cast %c5_i32 : i32 to index
    %c0_21 = arith.constant 0 : index
    %60 = vector.load %arg9[%59, %c0_21] : memref<8x32xf32, #tpu.memory_space<vmem>>, vector<1x32xf32>
    tpu.vector_store %arg9[%59, %c0_21], %58 {strides = array<i32>} : memref<8x32xf32, #tpu.memory_space<vmem>>, vector<1x32xf32>,
    %c6_i32 = arith.constant 6 : i32
    %61 = arith.addi %0, %c6_i32 : i32
    %62 = arith.index_cast %arg0 : i32 to index
    %63 = arith.index_cast %61 : i32 to index
    %64 = memref.load %arg2[%62, %63] : memref<2x8xi32, #tpu.memory_space<smem>>
    %c0_i32_22 = arith.constant 0 : i32
    %c30521_i32_23 = arith.constant 30521 : i32
    %65 = arith.maxsi %c0_i32_22, %64 : i32
    %66 = arith.minsi %c30521_i32_23, %65 : i32
    %67 = arith.index_cast %66 : i32 to index
    %c0_24 = arith.constant 0 : index
    %68 = vector.load %arg3[%67, %c0_24] : memref<30522x32xf32, #tpu.memory_space<vmem>>, vector<1x32xf32>
    %69 = arith.index_cast %c6_i32 : i32 to index
    %c0_25 = arith.constant 0 : index
    %70 = vector.load %arg9[%69, %c0_25] : memref<8x32xf32, #tpu.memory_space<vmem>>, vector<1x32xf32>
    tpu.vector_store %arg9[%69, %c0_25], %68 {strides = array<i32>} : memref<8x32xf32, #tpu.memory_space<vmem>>, vector<1x32xf32>,
    %c7_i32 = arith.constant 7 : i32
    %71 = arith.addi %0, %c7_i32 : i32
    %72 = arith.index_cast %arg0 : i32 to index
    %73 = arith.index_cast %71 : i32 to index
    %74 = memref.load %arg2[%72, %73] : memref<2x8xi32, #tpu.memory_space<smem>>
    %c0_i32_26 = arith.constant 0 : i32
    %c30521_i32_27 = arith.constant 30521 : i32
    %75 = arith.maxsi %c0_i32_26, %74 : i32
    %76 = arith.minsi %c30521_i32_27, %75 : i32
    %77 = arith.index_cast %76 : i32 to index
    %c0_28 = arith.constant 0 : index
    %78 = vector.load %arg3[%77, %c0_28] : memref<30522x32xf32, #tpu.memory_space<vmem>>, vector<1x32xf32>
    %79 = arith.index_cast %c7_i32 : i32 to index
    %c0_29 = arith.constant 0 : index
    %80 = vector.load %arg9[%79, %c0_29] : memref<8x32xf32, #tpu.memory_space<vmem>>, vector<1x32xf32>
    tpu.vector_store %arg9[%79, %c0_29], %78 {strides = array<i32>} : memref<8x32xf32, #tpu.memory_space<vmem>>, vector<1x32xf32>,
    %c8_i32_30 = arith.constant 8 : i32
    %81 = tpu.assume_multiple %0, 8 : i32
    %c0_31 = arith.constant 0 : index
    %c0_32 = arith.constant 0 : index
    %82 = vector.load %arg9[%c0_31, %c0_32] : memref<8x32xf32, #tpu.memory_space<vmem>>, vector<8x32xf32>
    %83 = arith.index_cast %81 : i32 to index
    %c0_33 = arith.constant 0 : index
    %84 = vector.load %arg4[%83, %c0_33] : memref<8x32xf32, #tpu.memory_space<vmem>>, vector<8x32xf32>
    %85 = arith.addf %82, %84 : vector<8x32xf32>
    %c0_34 = arith.constant 0 : index
    %c0_35 = arith.constant 0 : index
    %c0_36 = arith.constant 0 : index
    %86 = vector.load %arg5[%c0_34, %c0_35, %c0_36] : memref<1x8x32xf32, #tpu.memory_space<vmem>>, vector<1x8x32xf32>
    %87 = vector.shape_cast %86 : vector<1x8x32xf32> to vector<8x32xf32>
    %88 = arith.addf %85, %87 : vector<8x32xf32>
    %c0_37 = arith.constant 0 : index
    %c0_38 = arith.constant 0 : index
    %89 = vector.load %arg6[%c0_37, %c0_38] : memref<1x32xf32, #tpu.memory_space<vmem>>, vector<1x32xf32>
    %c0_39 = arith.constant 0 : index
    %c0_40 = arith.constant 0 : index
    %90 = vector.load %arg7[%c0_39, %c0_40] : memref<1x32xf32, #tpu.memory_space<vmem>>, vector<1x32xf32>
    %cst = arith.constant dense<0.000000e+00> : vector<8xf32>
    %91 = vector.multi_reduction <add>, %88, %cst [1] : vector<8x32xf32> to vector<8xf32>
    %92 = vector.shape_cast %91 : vector<8xf32> to vector<8x1xf32>
    %cst_41 = arith.constant 3.200000e+01 : f32
    %93 = vector.broadcast %cst_41 : f32 to vector<8x1xf32>
    %94 = arith.divf %92, %93 : vector<8x1xf32>
    %95 = vector.broadcast %94 : vector<8x1xf32> to vector<8x32xf32>
    %96 = arith.subf %88, %95 : vector<8x32xf32>
    %97 = arith.mulf %96, %96 : vector<8x32xf32>
    %cst_42 = arith.constant dense<0.000000e+00> : vector<8xf32>
    %98 = vector.multi_reduction <add>, %97, %cst_42 [1] : vector<8x32xf32> to vector<8xf32>
    %99 = vector.shape_cast %98 : vector<8xf32> to vector<8x1xf32>
    %cst_43 = arith.constant 3.200000e+01 : f32
    %100 = vector.broadcast %cst_43 : f32 to vector<8x1xf32>
    %101 = arith.divf %99, %100 : vector<8x1xf32>
    %102 = vector.broadcast %94 : vector<8x1xf32> to vector<8x32xf32>
    %103 = arith.subf %88, %102 : vector<8x32xf32>
    %cst_44 = arith.constant 9.99999996E-13 : f32
    %104 = vector.broadcast %cst_44 : f32 to vector<8x1xf32>
    %105 = arith.addf %101, %104 : vector<8x1xf32>
    %106 = math.rsqrt %105 : vector<8x1xf32>
    %107 = vector.broadcast %106 : vector<8x1xf32> to vector<8x32xf32>
    %108 = arith.mulf %103, %107 : vector<8x32xf32>
    %109 = vector.broadcast %89 : vector<1x32xf32> to vector<8x32xf32>
    %110 = arith.mulf %108, %109 : vector<8x32xf32>
    %111 = vector.broadcast %90 : vector<1x32xf32> to vector<8x32xf32>
    %112 = arith.addf %110, %111 : vector<8x32xf32>
    %c0_45 = arith.constant 0 : index
    %c0_46 = arith.constant 0 : index
    %c0_47 = arith.constant 0 : index
    %113 = vector.load %arg8[%c0_45, %c0_46, %c0_47] : memref<1x8x32xf32, #tpu.memory_space<vmem>>, vector<1x8x32xf32>
    %114 = vector.shape_cast %113 : vector<1x8x32xf32> to vector<8x32xf32>
    %115 = vector.shape_cast %112 : vector<8x32xf32> to vector<1x8x32xf32>
    tpu.vector_store %arg8[%c0_45, %c0_46, %c0_47], %115 {strides = array<i32>} : memref<1x8x32xf32, #tpu.memory_space<vmem>>, vector<1x8x32xf32>,
    return
  }
  func.func @transform_0(%arg0: i32, %arg1: i32, %arg2: memref<2x8xi32, #tpu.memory_space<smem>>) -> (i32, i32) {
    %c0_i32 = arith.constant 0 : i32
    %c0_i32_0 = arith.constant 0 : i32
    %c0_i32_1 = arith.constant 0 : i32
    return %c0_i32, %c0_i32_0 : i32, i32
  }
  func.func @transform_1(%arg0: i32, %arg1: i32, %arg2: memref<2x8xi32, #tpu.memory_space<smem>>) -> (i32, i32) {
    %c0_i32 = arith.constant 0 : i32
    %c0_i32_0 = arith.constant 0 : i32
    %c0_i32_1 = arith.constant 0 : i32
    return %c0_i32, %c0_i32_0 : i32, i32
  }
  func.func @transform_2(%arg0: i32, %arg1: i32, %arg2: memref<2x8xi32, #tpu.memory_space<smem>>) -> (i32, i32, i32) {
    %c0_i32 = arith.constant 0 : i32
    %c0_i32_0 = arith.constant 0 : i32
    return %arg0, %arg1, %c0_i32 : i32, i32, i32
  }
  func.func @transform_3(%arg0: i32, %arg1: i32, %arg2: memref<2x8xi32, #tpu.memory_space<smem>>) -> (i32, i32) {
    %c0_i32 = arith.constant 0 : i32
    %c0_i32_0 = arith.constant 0 : i32
    %c0_i32_1 = arith.constant 0 : i32
    return %c0_i32, %c0_i32_0 : i32, i32
  }
  func.func @transform_4(%arg0: i32, %arg1: i32, %arg2: memref<2x8xi32, #tpu.memory_space<smem>>) -> (i32, i32) {
    %c0_i32 = arith.constant 0 : i32
    %c0_i32_0 = arith.constant 0 : i32
    %c0_i32_1 = arith.constant 0 : i32
    return %c0_i32, %c0_i32_0 : i32, i32
  }
  func.func @transform_5(%arg0: i32, %arg1: i32, %arg2: memref<2x8xi32, #tpu.memory_space<smem>>) -> (i32, i32, i32) {
    %c0_i32 = arith.constant 0 : i32
    %c0_i32_0 = arith.constant 0 : i32
    return %arg0, %arg1, %c0_i32 : i32, i32, i32
  }
}

</mosaic_0001>

<llo_original>
// kernel: tpu_custom_call.1
$region0: #{tpu_custom_call.1}
  #allocation0 [shape = 'u32[]', space=smem, size = 0x4, offset = 0x4, fixed_abs, tag = 'smem constant byte address 0x4 - core index']
  #allocation1 [shape = 'u32[144,128]{1,0:T(1,128)}', space=vmem, size = 0x12000, scoped, tag = 'internal scratch']
  #allocation2 [shape = 'f32[8,32]{1,0:T(8,128)}', space=vmem, size = 0x1000, scoped, tag = 'scratch operand']
  #allocation3 [shape = 's32[1]{0}', space=sflag, size = 0x4, scoped, tag = 'scoped memory for tpu_custom_call.1']
  #allocation4 [shape = 'u8[1024]{0}', space=smem, size = 0x400, scoped, tag = 'prefetched SMEM operand 0']
  %s0 = inlined_call_operand.vmem [shape: s32[2,8], index: 0, kind: input, shape index: {}]
  %s1 = inlined_call_operand.vmem [shape: f32[30522,32], index: 1, kind: input, shape index: {}]
  %s2 = inlined_call_operand.vmem [shape: f32[8,32], index: 2, kind: input, shape index: {}]
  %s3 = inlined_call_operand.vmem [shape: f32[2,8,32], index: 3, kind: input, shape index: {}]
  %s4 = inlined_call_operand.vmem [shape: f32[1,32], index: 4, kind: input, shape index: {}]
  %s5 = inlined_call_operand.vmem [shape: f32[1,32], index: 5, kind: input, shape index: {}]
  %s6 = inlined_call_operand.hbm [shape: f32[2,8,32], index: 6, kind: output, shape index: {}]
  %s7 = sld [smem:[#allocation0]]
  $region53: #{tpu_custom_call.1} parent=0
    _
  %s9 = ssub.s32 1, %s7
  %s10 = scalar_select 0, %s9, %s7
  %s11 = sshll.u32 %s0, 4
  %s12 = int_to_ptr.vmem [resolvable:$true] %s11
  %14 = dma.vmem_to_smem %s12, 32, [#allocation4], [#allocation3]
  %15 = dma.done [#allocation3], 32
  %16 = sfence
  $region1: #{tpu_custom_call.1} parent=0
    #allocation5 [shape = 'u8[8192]{0}', space=vmem, size = 0x2000, scoped, tag = 'output window, operand 0']
    #allocation6 [shape = 's32[2]{0}', space=sflag, size = 0x8, scoped, tag = 'scoped memory for tpu_custom_call.1']
    %17 = vsyncpa [#allocation6], 0
    %s18 = scalar_lea.sflag [#allocation6], 1
    %19 = vsyncpa %s18, 0
    loop: start=0, step=1, limit=4
    $region2: #{tpu_custom_call.1} parent=1 // loop_pre_header
      _
    $region3: #{tpu_custom_call.1} parent=1 // loop_header
      %s21 = sphi 0, %s25
      %p22 = scmp.ge.s32.totalorder %s21, 4
      %s28 = sphi 0, %s40
      %s29 = sphi 0, %s36
      %s30 = sphi 0, %s28
      %s31 = sphi 0, %s29
      %s32 = sphi 0, %s30
      %s33 = sphi 0, %s31
      %s41 = sphi 0, %s41
      %s43 = sphi 0, %s41
      %s44 = sphi 0, %s43
      %s58 = sphi 0, %s44
      %s62 = sphi 0, %s62
      %s64 = sphi 0, %s62
      %s65 = sphi 0, %s64
      %s79 = sphi 0, %s65
      %s87 = sphi 0, %s89
      %s90 = sphi 0, %s87
      %s91 = sphi 0, %s90
      %s107 = sphi 0, %s91
      %s111 = sphi 0, %s111
      %s113 = sphi 0, %s111
      %s114 = sphi 0, %s113
      %s128 = sphi 0, %s114
      %s132 = sphi 0, %s132
      %s134 = sphi 0, %s132
      %s135 = sphi 0, %s134
      %s149 = sphi 0, %s135
      %s157 = sphi 0, %s159
      %s160 = sphi 0, %s157
      %s161 = sphi 0, %s160
      %s177 = sphi 0, %s161
    $region4: #{tpu_custom_call.1} parent=1 // loop_header_branch
      %24 = sbr.rel (%p22) target = $region8
    $region5: #{tpu_custom_call.1} parent=1 // loop_body
      %s26 = ssub.s32 %s21, 1
      %s27 = ssub.s32 %s21, 2
      %s34 = sadd.s32 1, %s29
      %p35 = scmp.ge.s32.totalorder %s34, 1
      %s36 = scalar_select %p35, 0, %s34
      %s37 = sadd.s32 1, %s28
      %s38 = scalar_select %p35, %s37, %s28
      %p39 = scmp.ge.s32.totalorder %s38, 2
      %s40 = scalar_select %p39, 0, %s38
      %s42 = sadd.s32 %s41, 1
      %p45 = scmp.eq.s32.totalorder %s21, 1
      %p46 = scmp.ne.s32.totalorder %s41, %s43
      %p47 = scmp.eq.s32.totalorder %s21, 0
      %p48 = por %p46, %p47
      %p49 = scmp.ne.s32.totalorder %s41, %s43
      %p50 = scmp.eq.s32.totalorder %s26, 1
      %p51 = por %p49, %p50
      %p52 = scmp.ne.s32.totalorder %s43, %s44
      %p53 = scmp.eq.s32.totalorder %s26, 0
      %p54 = por %p52, %p53
      %p55 = scmp.ne.s32.totalorder %s43, %s44
      %p56 = scmp.eq.s32.totalorder %s27, 1
      %p57 = por %p55, %p56
      %p59 = scmp.ne.s32.totalorder %s44, %s58
      %p60 = scmp.eq.s32.totalorder %s27, 0
      %p61 = por %p59, %p60
      %s63 = sadd.s32 %s62, 1
      %p66 = scmp.eq.s32.totalorder %s21, 1
      %p67 = scmp.ne.s32.totalorder %s62, %s64
      %p68 = scmp.eq.s32.totalorder %s21, 0
      %p69 = por %p67, %p68
      %p70 = scmp.ne.s32.totalorder %s62, %s64
      %p71 = scmp.eq.s32.totalorder %s26, 1
      %p72 = por %p70, %p71
      %p73 = scmp.ne.s32.totalorder %s64, %s65
      %p74 = scmp.eq.s32.totalorder %s26, 0
      %p75 = por %p73, %p74
      %p76 = scmp.ne.s32.totalorder %s64, %s65
      %p77 = scmp.eq.s32.totalorder %s27, 1
      %p78 = por %p76, %p77
      %p80 = scmp.ne.s32.totalorder %s65, %s79
      %p81 = scmp.eq.s32.totalorder %s27, 0
      %p82 = por %p80, %p81
      %s83 = ssub.s32 %s28, %s40
      %s84 = ssub.s32 %s29, %s36
      %s85 = sor.u32 %s83, %s84
      %p86 = scmp.eq.s32.totalorder %s85, 0
      %s88 = sadd.s32 %s87, 1
      %s89 = scalar_select %p86, %s87, %s88
      %p92 = pneg %p86
      %p93 = scmp.eq.s32.totalorder %s21, 1
      %p94 = por %p92, %p93
      %p95 = scmp.ne.s32.totalorder %s87, %s90
      %p96 = scmp.eq.s32.totalorder %s21, 0
      %p97 = por %p95, %p96
      %p98 = scmp.ne.s32.totalorder %s87, %s90
      %p99 = scmp.eq.s32.totalorder %s26, 1
      %p100 = por %p98, %p99
      %p101 = scmp.ne.s32.totalorder %s90, %s91
      %p102 = scmp.eq.s32.totalorder %s26, 0
      %p103 = por %p101, %p102
      %p104 = scmp.ne.s32.totalorder %s90, %s91
      %p105 = scmp.eq.s32.totalorder %s27, 1
      %p106 = por %p104, %p105
      %p108 = scmp.ne.s32.totalorder %s91, %s107
      %p109 = scmp.eq.s32.totalorder %s27, 0
      %p110 = por %p108, %p109
      %s112 = sadd.s32 %s111, 1
      %p115 = scmp.eq.s32.totalorder %s21, 1
      %p116 = scmp.ne.s32.totalorder %s111, %s113
      %p117 = scmp.eq.s32.totalorder %s21, 0
      %p118 = por %p116, %p117
      %p119 = scmp.ne.s32.totalorder %s111, %s113
      %p120 = scmp.eq.s32.totalorder %s26, 1
      %p121 = por %p119, %p120
      %p122 = scmp.ne.s32.totalorder %s113, %s114
      %p123 = scmp.eq.s32.totalorder %s26, 0
      %p124 = por %p122, %p123
      %p125 = scmp.ne.s32.totalorder %s113, %s114
      %p126 = scmp.eq.s32.totalorder %s27, 1
      %p127 = por %p125, %p126
      %p129 = scmp.ne.s32.totalorder %s114, %s128
      %p130 = scmp.eq.s32.totalorder %s27, 0
      %p131 = por %p129, %p130
      %s133 = sadd.s32 %s132, 1
      %p136 = scmp.eq.s32.totalorder %s21, 1
      %p137 = scmp.ne.s32.totalorder %s132, %s134
      %p138 = scmp.eq.s32.totalorder %s21, 0
      %p139 = por %p137, %p138
      %p140 = scmp.ne.s32.totalorder %s132, %s134
      %p141 = scmp.eq.s32.totalorder %s26, 1
      %p142 = por %p140, %p141
      %p143 = scmp.ne.s32.totalorder %s134, %s135
      %p144 = scmp.eq.s32.totalorder %s26, 0
      %p145 = por %p143, %p144
      %p146 = scmp.ne.s32.totalorder %s134, %s135
      %p147 = scmp.eq.s32.totalorder %s27, 1
      %p148 = por %p146, %p147
      %p150 = scmp.ne.s32.totalorder %s135, %s149
      %p151 = scmp.eq.s32.totalorder %s27, 0
      %p152 = por %p150, %p151
      %s153 = ssub.s32 %s28, %s40
      %s154 = ssub.s32 %s29, %s36
      %s155 = sor.u32 %s153, %s154
      %p156 = scmp.eq.s32.totalorder %s155, 0
      %s158 = sadd.s32 %s157, 1
      %s159 = scalar_select %p156, %s157, %s158
      %p162 = pneg %p156
      %p163 = scmp.eq.s32.totalorder %s21, 1
      %p164 = por %p162, %p163
      %p165 = scmp.ne.s32.totalorder %s157, %s160
      %p166 = scmp.eq.s32.totalorder %s21, 0
      %p167 = por %p165, %p166
      %p168 = scmp.ne.s32.totalorder %s157, %s160
      %p169 = scmp.eq.s32.totalorder %s26, 1
      %p170 = por %p168, %p169
      %p171 = scmp.ne.s32.totalorder %s160, %s161
      %p172 = scmp.eq.s32.totalorder %s26, 0
      %p173 = por %p171, %p172
      %p174 = scmp.ne.s32.totalorder %s160, %s161
      %p175 = scmp.eq.s32.totalorder %s27, 1
      %p176 = por %p174, %p175
      %p178 = scmp.ne.s32.totalorder %s161, %s177
      %p179 = scmp.eq.s32.totalorder %s27, 0
      %p180 = por %p178, %p179
      %p181 = scmp.le.s32.totalorder 1, %s21
      %p182 = scmp.lt.s32.totalorder %s21, 3
      %p183 = pnand %p181, %p182
      %p184 = pneg %p183
      // Predicated region
      $region9: #{tpu_custom_call.1} parent=5 // pred_check
        _
      $region10: #{tpu_custom_call.1} parent=5 // pred_check_branch
        %186 = sbr.rel (%p183) target = $region12
      $region11: #{tpu_custom_call.1} parent=5 // pred_region
        %s187 = ssub.s32 %s21, 1
        // Predicated region
        $region13: #{tpu_custom_call.1} parent=11 // pred_check
          %p188 = pneg %p54
        $region14: #{tpu_custom_call.1} parent=11 // pred_check_branch
          %190 = sbr.rel (%p188) target = $region16
        $region15: #{tpu_custom_call.1} parent=11 // pred_region
          _
        $region16: #{tpu_custom_call.1} parent=11 // pred_fallthru
          _
        // Predicated region
        $region17: #{tpu_custom_call.1} parent=11 // pred_check
          %p191 = pneg %p75
        $region18: #{tpu_custom_call.1} parent=11 // pred_check_branch
          %193 = sbr.rel (%p191) target = $region20
        $region19: #{tpu_custom_call.1} parent=11 // pred_region
          _
        $region20: #{tpu_custom_call.1} parent=11 // pred_fallthru
          _
        // Predicated region
        $region21: #{tpu_custom_call.1} parent=11 // pred_check
          %p194 = pneg %p124
        $region22: #{tpu_custom_call.1} parent=11 // pred_check_branch
          %196 = sbr.rel (%p194) target = $region24
        $region23: #{tpu_custom_call.1} parent=11 // pred_region
          _
        $region24: #{tpu_custom_call.1} parent=11 // pred_fallthru
          _
        // Predicated region
        $region25: #{tpu_custom_call.1} parent=11 // pred_check
          %p197 = pneg %p145
        $region26: #{tpu_custom_call.1} parent=11 // pred_check_branch
          %199 = sbr.rel (%p197) target = $region28
        $region27: #{tpu_custom_call.1} parent=11 // pred_region
          _
        $region28: #{tpu_custom_call.1} parent=11 // pred_fallthru
          _
      $region12: #{tpu_custom_call.1} parent=5 // pred_fallthru
        _
      %p200 = scmp.lt.s32.totalorder %s21, 2
      // Predicated region
      $region29: #{tpu_custom_call.1} parent=5 // pred_check
        %p201 = pneg %p200
      $region30: #{tpu_custom_call.1} parent=5 // pred_check_branch
        %203 = sbr.rel (%p201) target = $region32
      $region31: #{tpu_custom_call.1} parent=5 // pred_region
        // Predicated region
        $region33: #{tpu_custom_call.1} parent=31 // pred_check
          %p204 = pneg %p97
        $region34: #{tpu_custom_call.1} parent=31 // pred_check_branch
          %206 = sbr.rel (%p204) target = $region36
        $region35: #{tpu_custom_call.1} parent=31 // pred_region
          %p207 = scmp.lt.s32.totalorder %s28, 1
          %s208 = scalar_select %p207, %s28, 1
          %p209 = scmp.lt.s32.totalorder %s29, 0
          %s210 = scalar_select %p209, %s29, 0
          %s211 = sadd.s32 %s210, %s208
          %s212 = smul.addr %s211, 8
          %s213 = scalar_lea.vmem %s3, %s212
        $region36: #{tpu_custom_call.1} parent=31 // pred_fallthru
          _
      $region32: #{tpu_custom_call.1} parent=5 // pred_fallthru
        _
      %p214 = scmp.le.s32.totalorder 1, %s21
      %p215 = scmp.lt.s32.totalorder %s21, 3
      %p216 = pnand %p214, %p215
      %p217 = pneg %p216
      // Predicated region
      $region37: #{tpu_custom_call.1} parent=5 // pred_check
        _
      $region38: #{tpu_custom_call.1} parent=5 // pred_check_branch
        %219 = sbr.rel (%p216) target = $region40
      $region39: #{tpu_custom_call.1} parent=5 // pred_region
        %s220 = ssub.s32 %s21, 1
        %p221 = pneg %p54
        %p222 = pneg %p51
        %p223 = pneg %p75
        %p224 = pneg %p72
        %p225 = scmp.lt.s32.totalorder %s30, 1
        %s226 = scalar_select %p225, %s30, 1
        %p227 = scmp.lt.s32.totalorder %s31, 0
        %s228 = scalar_select %p227, %s31, 0
        %s229 = sadd.s32 %s228, %s226
        %s230 = smul.addr %s229, 8
        %s231 = scalar_lea.vmem %s3, %s230
        %p232 = pneg %p103
        %p233 = pneg %p100
        %p234 = pneg %p124
        %p235 = pneg %p121
        %p236 = pneg %p145
        %p237 = pneg %p142
        %p238 = pneg %p173
        %p239 = pneg %p170
        %s240 = sand.u32 %s160, 1
        %s241 = scalar_lea.sflag [#allocation6], %s240
        %s242 = sand.u32 %s160, 1
        %s243 = smul.addr %s242, 8
        %s244 = scalar_lea.vmem [#allocation5], %s243
        %p245 = scmp.lt.s32.totalorder %s30, 1
        %s246 = scalar_select %p245, %s30, 1
        %p247 = scmp.lt.s32.totalorder %s31, 0
        %s248 = scalar_select %p247, %s31, 0
        %s249 = sadd.s32 %s248, %s246
        %s250 = smul.addr %s249, 8
        %s251 = scalar_lea.vmem %s3, %s250
        %s252 = smul.u32 %s31, 8
        %s253 = sshra.s32 %s252, 7
        %s254 = sand.u32 %s252, 127
        %s255 = sadd.s32 %s253, %s30
        %s256 = smul.u32 %s255, 128
        %s257 = sshra.s32 %s252, 7
        %s258 = sand.u32 %s252, 127
        %s259 = sadd.s32 %s256, %s258
        %s260 = sld [smem:[#allocation4 + %s259]]
        %p261 = scmp.gt.s32.totalorder %s260, 0
        %s262 = scalar_select %p261, %s260, 0
        %p263 = scmp.lt.s32.totalorder %s262, 30521
        %s264 = scalar_select %p263, %s262, 30521
        %s265 = scalar_lea.vmem %s1, %s264
        %v266 = vld [vmem:[%s265] sm:$0x1]
        %vm267 = vcmask 253952
        %268 = vst.msk [vmem:[#allocation2] sm:$0x1] %vm267, %v266
        %s269 = sadd.s32 %s252, 1
        %s270 = sshra.s32 %s269, 7
        %s271 = sand.u32 %s269, 127
        %s272 = sadd.s32 %s270, %s30
        %s273 = smul.u32 %s272, 128
        %s274 = sshra.s32 %s269, 7
        %s275 = sand.u32 %s269, 127
        %s276 = sadd.s32 %s273, %s275
        %s277 = sld [smem:[#allocation4 + %s276]]
        %p278 = scmp.gt.s32.totalorder %s277, 0
        %s279 = scalar_select %p278, %s277, 0
        %p280 = scmp.lt.s32.totalorder %s279, 30521
        %s281 = scalar_select %p280, %s279, 30521
        %s282 = scalar_lea.vmem %s1, %s281
        %v283 = vld [vmem:[%s282] sm:$0x1]
        %284 = vst.msk [vmem:[#allocation2 + $0x1] sm:$0x1] %vm267, %v283
        %s285 = sadd.s32 %s252, 2
        %s286 = sshra.s32 %s285, 7
        %s287 = sand.u32 %s285, 127
        %s288 = sadd.s32 %s286, %s30
        %s289 = smul.u32 %s288, 128
        %s290 = sshra.s32 %s285, 7
        %s291 = sand.u32 %s285, 127
        %s292 = sadd.s32 %s289, %s291
        %s293 = sld [smem:[#allocation4 + %s292]]
        %p294 = scmp.gt.s32.totalorder %s293, 0
        %s295 = scalar_select %p294, %s293, 0
        %p296 = scmp.lt.s32.totalorder %s295, 30521
        %s297 = scalar_select %p296, %s295, 30521
        %s298 = scalar_lea.vmem %s1, %s297
        %v299 = vld [vmem:[%s298] sm:$0x1]
        %300 = vst.msk [vmem:[#allocation2 + $0x2] sm:$0x1] %vm267, %v299
        %s301 = sadd.s32 %s252, 3
        %s302 = sshra.s32 %s301, 7
        %s303 = sand.u32 %s301, 127
        %s304 = sadd.s32 %s302, %s30
        %s305 = smul.u32 %s304, 128
        %s306 = sshra.s32 %s301, 7
        %s307 = sand.u32 %s301, 127
        %s308 = sadd.s32 %s305, %s307
        %s309 = sld [smem:[#allocation4 + %s308]]
        %p310 = scmp.gt.s32.totalorder %s309, 0
        %s311 = scalar_select %p310, %s309, 0
        %p312 = scmp.lt.s32.totalorder %s311, 30521
        %s313 = scalar_select %p312, %s311, 30521
        %s314 = scalar_lea.vmem %s1, %s313
        %v315 = vld [vmem:[%s314] sm:$0x1]
        %316 = vst.msk [vmem:[#allocation2 + $0x3] sm:$0x1] %vm267, %v315
        %s317 = sadd.s32 %s252, 4
        %s318 = sshra.s32 %s317, 7
        %s319 = sand.u32 %s317, 127
        %s320 = sadd.s32 %s318, %s30
        %s321 = smul.u32 %s320, 128
        %s322 = sshra.s32 %s317, 7
        %s323 = sand.u32 %s317, 127
        %s324 = sadd.s32 %s321, %s323
        %s325 = sld [smem:[#allocation4 + %s324]]
        %p326 = scmp.gt.s32.totalorder %s325, 0
        %s327 = scalar_select %p326, %s325, 0
        %p328 = scmp.lt.s32.totalorder %s327, 30521
        %s329 = scalar_select %p328, %s327, 30521
        %s330 = scalar_lea.vmem %s1, %s329
        %v331 = vld [vmem:[%s330] sm:$0x1]
        %332 = vst.msk [vmem:[#allocation2 + $0x4] sm:$0x1] %vm267, %v331
        %s333 = sadd.s32 %s252, 5
        %s334 = sshra.s32 %s333, 7
        %s335 = sand.u32 %s333, 127
        %s336 = sadd.s32 %s334, %s30
        %s337 = smul.u32 %s336, 128
        %s338 = sshra.s32 %s333, 7
        %s339 = sand.u32 %s333, 127
        %s340 = sadd.s32 %s337, %s339
        %s341 = sld [smem:[#allocation4 + %s340]]
        %p342 = scmp.gt.s32.totalorder %s341, 0
        %s343 = scalar_select %p342, %s341, 0
        %p344 = scmp.lt.s32.totalorder %s343, 30521
        %s345 = scalar_select %p344, %s343, 30521
        %s346 = scalar_lea.vmem %s1, %s345
        %v347 = vld [vmem:[%s346] sm:$0x1]
        %348 = vst.msk [vmem:[#allocation2 + $0x5] sm:$0x1] %vm267, %v347
        %s349 = sadd.s32 %s252, 6
        %s350 = sshra.s32 %s349, 7
        %s351 = sand.u32 %s349, 127
        %s352 = sadd.s32 %s350, %s30
        %s353 = smul.u32 %s352, 128
        %s354 = sshra.s32 %s349, 7
        %s355 = sand.u32 %s349, 127
        %s356 = sadd.s32 %s353, %s355
        %s357 = sld [smem:[#allocation4 + %s356]]
        %p358 = scmp.gt.s32.totalorder %s357, 0
        %s359 = scalar_select %p358, %s357, 0
        %p360 = scmp.lt.s32.totalorder %s359, 30521
        %s361 = scalar_select %p360, %s359, 30521
        %s362 = scalar_lea.vmem %s1, %s361
        %v363 = vld [vmem:[%s362] sm:$0x1]
        %364 = vst.msk [vmem:[#allocation2 + $0x6] sm:$0x1] %vm267, %v363
        %s365 = sadd.s32 %s252, 7
        %s366 = sshra.s32 %s365, 7
        %s367 = sand.u32 %s365, 127
        %s368 = sadd.s32 %s366, %s30
        %s369 = smul.u32 %s368, 128
        %s370 = sshra.s32 %s365, 7
        %s371 = sand.u32 %s365, 127
        %s372 = sadd.s32 %s369, %s371
        %s373 = sld [smem:[#allocation4 + %s372]]
        %p374 = scmp.gt.s32.totalorder %s373, 0
        %s375 = scalar_select %p374, %s373, 0
        %p376 = scmp.lt.s32.totalorder %s375, 30521
        %s377 = scalar_select %p376, %s375, 30521
        %s378 = scalar_lea.vmem %s1, %s377
        %v379 = vld [vmem:[%s378] sm:$0x1]
        %380 = vst.msk [vmem:[#allocation2 + $0x7] sm:$0x1] %vm267, %v379
        %v381 = vld [vmem:[#allocation2] sm:$0xff]
        %s382 = scalar_lea.vmem %s2, %s252
        %v383 = vld [vmem:[%s382] sm:$0xff]
        %v384 = vadd.f32 %v381, %v383
        %v385 = vld [vmem:[%s251] sm:$0xff]
        %v386 = vadd.f32 %v384, %v385
        %v387 = vld [vmem:[%s4] sm:$0x1]
        %v388 = vld [vmem:[%s5] sm:$0x1]
        %vm389 = vcmask 261120
        %v390 = vsel %vm389, %v386, 0.0
        %391 = vadd.xlane.f32.xlu0 %v390
        %v392 = vpop.xlane.xlu0 %391
        %v393 = vrcp.pop 32.0
        %v394 = vmul.f32 %v392, %v393
        %v395 = vsub.f32 %v386, %v394
        %v396 = vmul.f32 %v395, %v395
        %v397 = vsel %vm389, %v396, 0.0
        %398 = vadd.xlane.f32.xlu0 %v397
        %v399 = vpop.xlane.xlu0 %398
        %v400 = vmul.f32 %v399, %v393
        %v401 = vadd.f32 %v400, 1e-12
        %v402 = vrsqrt.pop %v401
        %v403 = vmul.f32 %v395, %v402
        %v405 = vlaneseq
        %v406 = vshrl.u32 %v405, 7
        %v407 = vsub.s32 0, %v406
        %v408 = vrot.slane %v387, %v407
        %v410 = vmul.f32 %v403, %v408
        %v412 = vlaneseq
        %v413 = vshrl.u32 %v412, 7
        %v414 = vsub.s32 0, %v413
        %v415 = vrot.slane %v388, %v414
        %v417 = vadd.f32 %v410, %v415
        %418 = vst.msk [vmem:[%s244] sm:$0xff] %vm389, %v417
        %s419 = sand.u32 %s160, 1
        %s420 = scalar_lea.sflag [#allocation6], %s419
        %s421 = sand.u32 %s160, 1
        %s422 = smul.addr %s421, 8
        %s423 = scalar_lea.vmem [#allocation5], %s422
        // Predicated region
        $region41: #{tpu_custom_call.1} parent=39 // pred_check
          %p424 = pneg %p170
        $region42: #{tpu_custom_call.1} parent=39 // pred_check_branch
          %426 = sbr.rel (%p424) target = $region44
        $region43: #{tpu_custom_call.1} parent=39 // pred_region
          %s428 = ssub.s32 128, 128
          %429 = vsyncadd %s420, %s428
          %s430 = sadd.s32 %s31, %s30
          %s431 = smul.addr %s430, 128
          %s432 = scalar_lea.hbm %s6, %s431
          %s434 = sshll.u32 %s423, 4
          %s435 = int_to_ptr.vmem [resolvable:$true] %s434
          %437 = dma.vmem_to_hbm [thread:$0]  %s435, 128, %s432, %s420
        $region44: #{tpu_custom_call.1} parent=39 // pred_fallthru
          _
      $region40: #{tpu_custom_call.1} parent=5 // pred_fallthru
        _
      %p438 = scmp.le.s32.totalorder 2, %s21
      // Predicated region
      $region45: #{tpu_custom_call.1} parent=5 // pred_check
        %p439 = pneg %p438
      $region46: #{tpu_custom_call.1} parent=5 // pred_check_branch
        %441 = sbr.rel (%p439) target = $region48
      $region47: #{tpu_custom_call.1} parent=5 // pred_region
        %s442 = ssub.s32 %s21, 2
        // Predicated region
        $region49: #{tpu_custom_call.1} parent=47 // pred_check
          %p443 = pneg %p176
        $region50: #{tpu_custom_call.1} parent=47 // pred_check_branch
          %445 = sbr.rel (%p443) target = $region52
        $region51: #{tpu_custom_call.1} parent=47 // pred_region
          %s446 = sand.u32 %s161, 1
          %s447 = scalar_lea.sflag [#allocation6], %s446
          %s448 = sand.u32 %s161, 1
          %s449 = smul.addr %s448, 8
          %s450 = scalar_lea.vmem [#allocation5], %s449
          %451 = dma.done %s447, 128
        $region52: #{tpu_custom_call.1} parent=47 // pred_fallthru
          _
      $region48: #{tpu_custom_call.1} parent=5 // pred_fallthru
        _
    $region6: #{tpu_custom_call.1} parent=1 // loop_footer
      %s25 = sadd.s32 1, %s21
    $region7: #{tpu_custom_call.1} parent=1 // loop_footer_branch
      %20 = sbr.rel target = $region3
    $region8: #{tpu_custom_call.1} parent=1 // loop_exit
      _
    %452 = vsyncpa [#allocation6], 1
    %s453 = scalar_lea.sflag [#allocation6], 1
    %454 = vsyncpa %s453, 1

</llo_original>
